<compile_context>
chip_gen: v6e
topology: v6e:2x2x1
jax: 0.10.0
libtpu: 0.0.40
codegen_flags: <defaults>
</compile_context>

<pallas_src>
import functools

import jax
import jax.numpy as jnp
from jax.experimental import pallas as pl
from jax.experimental.pallas import tpu as pltpu

LANE = 128  # TPU lane width; fc2 output is padded to a multiple of this


def dnn_kernel(x_ref, w1_ref, b1_ref, w2_ref, b2_ref, o_ref):
    # fc1: (TB, F) @ (F, 128) + (1, 128), ReLU   (all f32 on the MXU/VPU)
    h = jnp.dot(x_ref[...], w1_ref[...], preferred_element_type=jnp.float32)
    h = jnp.maximum(h + b1_ref[...], 0.0)
    # fc2: (TB, 128) @ (128, 128-padded) + (1, 128-padded)  -> lane-dense store
    y = jnp.dot(h, w2_ref[...], preferred_element_type=jnp.float32)
    o_ref[...] = (y + b2_ref[...]).astype(o_ref.dtype)


def _pad_last(a, n):
    pad = n - a.shape[-1]
    if pad <= 0:
        return a
    return jnp.pad(a, [(0, 0)] * (a.ndim - 1) + [(0, pad)])


@functools.partial(jax.jit, static_argnames=("block_b",))
def dnn_forward(x, w1, b1, w2, b2, *, block_b=512):
    """y = relu(x @ w1 + b1) @ w2 + b2, returned with the true A columns."""
    B, F = x.shape
    H = w1.shape[1]
    A = w2.shape[1]

    # Lane-dense fc2: pad output columns up to a multiple of 128 (zero cols).
    NP = max(LANE, ((A + LANE - 1) // LANE) * LANE)
    w2p = _pad_last(w2, NP)
    b2p = _pad_last(b2, NP)

    if B <= block_b:
        # Overhead-minimal path: no grid, no pipelining machinery; all operands
        # are whole-array VMEM-resident refs and the kernel runs exactly once.
        yp = pl.pallas_call(
            dnn_kernel,
            out_shape=jax.ShapeDtypeStruct((B, NP), x.dtype),
            in_specs=[pl.BlockSpec(memory_space=pltpu.MemorySpace.VMEM)] * 5,
            out_specs=pl.BlockSpec(memory_space=pltpu.MemorySpace.VMEM),
        )(x, w1, b1, w2p, b2p)
        return yp[:, :A]

    # Batched path: tile over B so the kernel becomes a pipelined streaming
    # matmul; weights/biases keep index_map (0, 0) so they are DMA'd once and
    # stay VMEM-resident across batch tiles.
    TB = block_b
    Bp = ((B + TB - 1) // TB) * TB
    xp = jnp.pad(x, ((0, Bp - B), (0, 0))) if Bp != B else x

    yp = pl.pallas_call(
        dnn_kernel,
        out_shape=jax.ShapeDtypeStruct((Bp, NP), x.dtype),
        grid=(Bp // TB,),
        in_specs=[
            pl.BlockSpec((TB, F), lambda i: (i, 0)),   # x: streamed batch tiles
            pl.BlockSpec((F, H), lambda i: (0, 0)),    # w1: resident
            pl.BlockSpec((1, H), lambda i: (0, 0)),    # b1: resident
            pl.BlockSpec((H, NP), lambda i: (0, 0)),   # w2 (padded): resident
            pl.BlockSpec((1, NP), lambda i: (0, 0)),   # b2 (padded): resident
        ],
        out_specs=pl.BlockSpec((TB, NP), lambda i: (i, 0)),
        compiler_params=pltpu.CompilerParams(
            # batch tiles are independent -> v7x's 2 TensorCores split the grid
            dimension_semantics=("parallel",),
            # budgeted for v7x (64 MiB physical): 2x(TB*F + TB*NP)*4B + weights << 32 MiB
            vmem_limit_bytes=32 * 1024 * 1024,
        ),
    )(xp, w1, b1, w2p, b2p)
    return yp[:B, :A]


def init_params(key, n_features, n_actions, hidden=128):
    """Mirror PyTorch nn.Linear default init: U(-1/sqrt(fan_in), 1/sqrt(fan_in))."""
    k1, k2, k3, k4 = jax.random.split(key, 4)
    bound1 = 1.0 / jnp.sqrt(jnp.float32(n_features))
    bound2 = 1.0 / jnp.sqrt(jnp.float32(hidden))
    # stored as (in, out) = transpose of PyTorch's (out, in) weight
    w1 = jax.random.uniform(k1, (n_features, hidden), jnp.float32, -bound1, bound1)
    b1 = jax.random.uniform(k2, (1, hidden), jnp.float32, -bound1, bound1)
    w2 = jax.random.uniform(k3, (hidden, n_actions), jnp.float32, -bound2, bound2)
    b2 = jax.random.uniform(k4, (1, n_actions), jnp.float32, -bound2, bound2)
    return w1, b1, w2, b2


def _ref(x, w1, b1, w2, b2):
    return jnp.maximum(x @ w1 + b1, 0.0) @ w2 + b2


if __name__ == "__main__":
    key = jax.random.PRNGKey(0)
    k_x, k_x2, k_p = jax.random.split(key, 3)

    n_features = 16   # one-hot-ish FrozenLake state encoding
    n_actions = 4
    w1, b1, w2, b2 = init_params(k_p, n_features, n_actions)

    # Small batch -> grid-less single-invocation path.
    batch = 8
    x = jax.random.normal(k_x, (batch, n_features), jnp.float32)
    out = jax.block_until_ready(dnn_forward(x, w1, b1, w2, b2))
    assert out.shape == (batch, n_actions)
    assert jnp.allclose(out, _ref(x, w1, b1, w2, b2), atol=1e-4, rtol=1e-4)

    # Larger batch (non-multiple of the tile) -> batch-tiled, pipelined path.
    big_batch = 1200
    xb = jax.random.normal(k_x2, (big_batch, n_features), jnp.float32)
    outb = jax.block_until_ready(dnn_forward(xb, w1, b1, w2, b2))
    assert outb.shape == (big_batch, n_actions)
    assert jnp.allclose(outb, _ref(xb, w1, b1, w2, b2), atol=1e-4, rtol=1e-4)

    print("KERNEL_OK")
</pallas_src>

<mosaic_0001>
module attributes {stable_mosaic.version = 11 : i64} {
  func.func @dnn_kernel(%arg0: memref<8x16xf32, #tpu.memory_space<vmem>>, %arg1: memref<16x128xf32, #tpu.memory_space<vmem>>, %arg2: memref<1x128xf32, #tpu.memory_space<vmem>>, %arg3: memref<128x128xf32, #tpu.memory_space<vmem>>, %arg4: memref<1x128xf32, #tpu.memory_space<vmem>>, %arg5: memref<8x128xf32, #tpu.memory_space<vmem>>) attributes {dimension_semantics = [], scalar_prefetch = 0 : i64, scratch_operands = 0 : i64, tpu.core_type = #tpu.core_type<tc>} {
    %c0 = arith.constant 0 : index
    %c0_0 = arith.constant 0 : index
    %0 = vector.load %arg0[%c0, %c0_0] : memref<8x16xf32, #tpu.memory_space<vmem>>, vector<8x16xf32>
    %c0_1 = arith.constant 0 : index
    %c0_2 = arith.constant 0 : index
    %1 = vector.load %arg1[%c0_1, %c0_2] : memref<16x128xf32, #tpu.memory_space<vmem>>, vector<16x128xf32>
    %cst = arith.constant dense<0.000000e+00> : vector<8x128xf32>
    %2 = tpu.matmul %0, %1, %cst {dimension_numbers = #tpu.dot_dimension_numbers<[1], [0], [0], [1], [0, 0, 1, 1], [], []>} : vector<8x16xf32>, vector<16x128xf32>, vector<8x128xf32> -> vector<8x128xf32>
    %c0_3 = arith.constant 0 : index
    %c0_4 = arith.constant 0 : index
    %3 = vector.load %arg2[%c0_3, %c0_4] : memref<1x128xf32, #tpu.memory_space<vmem>>, vector<1x128xf32>
    %4 = vector.broadcast %3 : vector<1x128xf32> to vector<8x128xf32>
    %5 = arith.addf %2, %4 : vector<8x128xf32>
    %cst_5 = arith.constant 0.000000e+00 : f32
    %6 = vector.broadcast %cst_5 : f32 to vector<8x128xf32>
    %7 = arith.maximumf %5, %6 : vector<8x128xf32>
    %c0_6 = arith.constant 0 : index
    %c0_7 = arith.constant 0 : index
    %8 = vector.load %arg3[%c0_6, %c0_7] : memref<128x128xf32, #tpu.memory_space<vmem>>, vector<128x128xf32>
    %cst_8 = arith.constant dense<0.000000e+00> : vector<8x128xf32>
    %9 = tpu.matmul %7, %8, %cst_8 {dimension_numbers = #tpu.dot_dimension_numbers<[1], [0], [0], [1], [0, 0, 1, 1], [], []>} : vector<8x128xf32>, vector<128x128xf32>, vector<8x128xf32> -> vector<8x128xf32>
    %c0_9 = arith.constant 0 : index
    %c0_10 = arith.constant 0 : index
    %10 = vector.load %arg4[%c0_9, %c0_10] : memref<1x128xf32, #tpu.memory_space<vmem>>, vector<1x128xf32>
    %11 = vector.broadcast %10 : vector<1x128xf32> to vector<8x128xf32>
    %12 = arith.addf %9, %11 : vector<8x128xf32>
    %c0_11 = arith.constant 0 : index
    %c0_12 = arith.constant 0 : index
    %13 = vector.load %arg5[%c0_11, %c0_12] : memref<8x128xf32, #tpu.memory_space<vmem>>, vector<8x128xf32>
    tpu.vector_store %arg5[%c0_11, %c0_12], %12 {strides = array<i32>} : memref<8x128xf32, #tpu.memory_space<vmem>>, vector<8x128xf32>,
    return
  }
}

</mosaic_0001>

<llo_original>
// kernel: dnn_forward.1
$region0: #{dnn_forward.1}
  #allocation0 [shape = 'u32[]', space=smem, size = 0x4, offset = 0x4, fixed_abs, tag = 'smem constant byte address 0x4 - core index']
  #allocation1 [shape = 'u32[144,128]{1,0:T(1,128)}', space=vmem, size = 0x12000, scoped, tag = 'internal scratch']
  %s0 = inlined_call_operand.vmem [shape: f32[8,16], index: 0, kind: input, shape index: {}]
  %s1 = inlined_call_operand.vmem [shape: f32[16,128], index: 1, kind: input, shape index: {}]
  %s2 = inlined_call_operand.vmem [shape: f32[1,128], index: 2, kind: input, shape index: {}]
  %s3 = inlined_call_operand.vmem [shape: f32[128,128], index: 3, kind: input, shape index: {}]
  %s4 = inlined_call_operand.vmem [shape: f32[1,128], index: 4, kind: input, shape index: {}]
  %s5 = inlined_call_operand.vmem [shape: f32[8,128], index: 5, kind: output, shape index: {}]
  %s6 = sld [smem:[#allocation0]]
  $region30: #{dnn_forward.1} parent=0
    _
  %s8 = ssub.s32 1, %s6
  %s9 = scalar_select 0, %s8, %s6
  // Predicated region
  $region2: #{dnn_forward.1} parent=0 // pred_check
    _
  $region3: #{dnn_forward.1} parent=0 // pred_check_branch
    %11 = sbr.rel (0) target = $region5
  $region4: #{dnn_forward.1} parent=0 // pred_region
    _
  $region5: #{dnn_forward.1} parent=0 // pred_fallthru
    _
  // Predicated region
  $region6: #{dnn_forward.1} parent=0 // pred_check
    _
  $region7: #{dnn_forward.1} parent=0 // pred_check_branch
    %13 = sbr.rel (0) target = $region9
  $region8: #{dnn_forward.1} parent=0 // pred_region
    _
  $region9: #{dnn_forward.1} parent=0 // pred_fallthru
    _
  // Predicated region
  $region10: #{dnn_forward.1} parent=0 // pred_check
    _
  $region11: #{dnn_forward.1} parent=0 // pred_check_branch
    %15 = sbr.rel (0) target = $region13
  $region12: #{dnn_forward.1} parent=0 // pred_region
    _
  $region13: #{dnn_forward.1} parent=0 // pred_fallthru
    _
  // Predicated region
  $region14: #{dnn_forward.1} parent=0 // pred_check
    _
  $region15: #{dnn_forward.1} parent=0 // pred_check_branch
    %17 = sbr.rel (0) target = $region17
  $region16: #{dnn_forward.1} parent=0 // pred_region
    _
  $region17: #{dnn_forward.1} parent=0 // pred_fallthru
    _
  // Predicated region
  $region18: #{dnn_forward.1} parent=0 // pred_check
    _
  $region19: #{dnn_forward.1} parent=0 // pred_check_branch
    %19 = sbr.rel (0) target = $region21
  $region20: #{dnn_forward.1} parent=0 // pred_region
    _
  $region21: #{dnn_forward.1} parent=0 // pred_fallthru
    _
  %v20 = vld [vmem:[%s0] sm:$0xff]
  %v21 = vld [vmem:[%s1] sm:$0xff]
  %v22 = vld [vmem:[%s1 + $0x8] sm:$0xff]
  %v23 = vld [vmem:[%s2] sm:$0x1]
  %v25 = vlaneseq
  %v26 = vshrl.u32 %v25, 7
  %v27 = vsub.s32 0, %v26
  %v28 = vrot.slane %v23, %v27
  %vm30 = vcmask 130048
  %v32 = vsel %vm30, %v20, 0
  %34 = vmatprep.subr.mxu0 0.0
  %35 = vmatpush1.msra.mxu0 0.0
  %36 = vmatprep.subr.mxu0 0.0
  %37 = vmatpush1.msra.mxu0 0.0
  %38 = vmatprep.subr.mxu0 0.0
  %39 = vmatpush1.msra.mxu0 0.0
  %40 = vmatprep.subr.mxu0 0.0
  %41 = vmatpush1.msra.mxu0 0.0
  %42 = vmatprep.subr.mxu0 0.0
  %43 = vmatpush1.msra.mxu0 0.0
  %44 = vmatprep.subr.mxu0 0.0
  %45 = vmatpush1.msra.mxu0 0.0
  %46 = vmatprep.subr.mxu0 0.0
  %47 = vmatpush1.msra.mxu0 0.0
  %48 = vmatprep.subr.mxu0 0.0
  %49 = vmatpush1.msra.mxu0 0.0
  %50 = vmatprep.subr.mxu0 0.0
  %51 = vmatpush1.msra.mxu0 0.0
  %52 = vmatprep.subr.mxu0 0.0
  %53 = vmatpush1.msra.mxu0 0.0
  %54 = vmatprep.subr.mxu0 0.0
  %55 = vmatpush1.msra.mxu0 0.0
  %56 = vmatprep.subr.mxu0 0.0
  %57 = vmatpush1.msra.mxu0 0.0
  %58 = vmatprep.subr.mxu0 0.0
  %59 = vmatpush1.msra.mxu0 0.0
  %60 = vmatprep.subr.mxu0 0.0
  %61 = vmatpush1.msra.mxu0 0.0
  %62 = vmatprep.subr.mxu0 0.0
  %63 = vmatpush1.msra.mxu0 %v22
  %64 = vmatprep.subr.mxu0 0.0
  %65 = vmatpush1.msra.mxu0 %v21
  %66 = vmatprep.subr.mxu0 0.0
  %67 = vmatpush2.msra.mxu0 0.0
  %68 = vmatprep.subr.mxu0 0.0
  %69 = vmatpush2.msra.mxu0 0.0
  %70 = vmatprep.subr.mxu0 0.0
  %71 = vmatpush2.msra.mxu0 0.0
  %72 = vmatprep.subr.mxu0 0.0
  %73 = vmatpush2.msra.mxu0 0.0
  %74 = vmatprep.subr.mxu0 0.0
  %75 = vmatpush2.msra.mxu0 0.0
  %76 = vmatprep.subr.mxu0 0.0
  %77 = vmatpush2.msra.mxu0 0.0
  %78 = vmatprep.subr.mxu0 0.0
  %79 = vmatpush2.msra.mxu0 0.0
  %80 = vmatprep.subr.mxu0 0.0
  %81 = vmatpush2.msra.mxu0 0.0
  %82 = vmatprep.subr.mxu0 0.0
  %83 = vmatpush2.msra.mxu0 0.0
  %84 = vmatprep.subr.mxu0 0.0
  %85 = vmatpush2.msra.mxu0 0.0
  %86 = vmatprep.subr.mxu0 0.0
  %87 = vmatpush2.msra.mxu0 0.0
  %88 = vmatprep.subr.mxu0 0.0
  %89 = vmatpush2.msra.mxu0 0.0
  %90 = vmatprep.subr.mxu0 0.0
  %91 = vmatpush2.msra.mxu0 0.0
  %92 = vmatprep.subr.mxu0 0.0
  %93 = vmatpush2.msra.mxu0 0.0
  %94 = vmatprep.subr.mxu0 0.0
  %95 = vmatpush2.msra.mxu0 0.0
  %96 = vmatprep.subr.mxu0 0.0
  %97 = vmatpush2.msra.mxu0 0.0
  %98 = vmatprep.mubr.f32.mxu0 0.0
  %99 = vmatmul.mubr.f32.gmra.mxu0 %v32
  %v100 = vpop.f32.mrf.mxu0
  %v101 = vadd.f32 %v28, %v100
  %v102 = vpop.f32.mrf.mxu0
  %103 = vdwg.mxu0
  %v104 = vmax.f32 %v101, 0.0
  %v105 = vld [vmem:[%s3] sm:$0xff]
  %v106 = vld [vmem:[%s3 + $0x8] sm:$0xff]
  %v107 = vld [vmem:[%s3 + $0x10] sm:$0xff]
  %v108 = vld [vmem:[%s3 + $0x18] sm:$0xff]
  %v109 = vld [vmem:[%s3 + $0x20] sm:$0xff]
  %v110 = vld [vmem:[%s3 + $0x28] sm:$0xff]
  %v111 = vld [vmem:[%s3 + $0x30] sm:$0xff]
  %v112 = vld [vmem:[%s3 + $0x38] sm:$0xff]
  %v113 = vld [vmem:[%s3 + $0x40] sm:$0xff]
  %v114 = vld [vmem:[%s3 + $0x48] sm:$0xff]
  %v115 = vld [vmem:[%s3 + $0x50] sm:$0xff]
  %v116 = vld [vmem:[%s3 + $0x58] sm:$0xff]
  %v117 = vld [vmem:[%s3 + $0x60] sm:$0xff]
  %v118 = vld [vmem:[%s3 + $0x68] sm:$0xff]
  %v119 = vld [vmem:[%s3 + $0x70] sm:$0xff]
  %v120 = vld [vmem:[%s3 + $0x78] sm:$0xff]
  %v121 = vld [vmem:[%s4] sm:$0x1]
  %v123 = vlaneseq
  %v124 = vshrl.u32 %v123, 7
  %v125 = vsub.s32 0, %v124
  %v126 = vrot.slane %v121, %v125
  %128 = vmatprep.subr.mxu0 0.0
  %129 = vmatpush1.msra.mxu0 %v120
  %130 = vmatprep.subr.mxu0 0.0
  %131 = vmatpush1.msra.mxu0 %v119
  %132 = vmatprep.subr.mxu0 0.0
  %133 = vmatpush1.msra.mxu0 %v118
  %134 = vmatprep.subr.mxu0 0.0
  %135 = vmatpush1.msra.mxu0 %v117
  %136 = vmatprep.subr.mxu0 0.0
  %137 = vmatpush1.msra.mxu0 %v116
  %138 = vmatprep.subr.mxu0 0.0
  %139 = vmatpush1.msra.mxu0 %v115
  %140 = vmatprep.subr.mxu0 0.0
  %141 = vmatpush1.msra.mxu0 %v114
  %142 = vmatprep.subr.mxu0 0.0
  %143 = vmatpush1.msra.mxu0 %v113
  %144 = vmatprep.subr.mxu0 0.0
  %145 = vmatpush1.msra.mxu0 %v112
  %146 = vmatprep.subr.mxu0 0.0
  %147 = vmatpush1.msra.mxu0 %v111
  %148 = vmatprep.subr.mxu0 0.0
  %149 = vmatpush1.msra.mxu0 %v110
  %150 = vmatprep.subr.mxu0 0.0
  %151 = vmatpush1.msra.mxu0 %v109
  %152 = vmatprep.subr.mxu0 0.0
  %153 = vmatpush1.msra.mxu0 %v108
  %154 = vmatprep.subr.mxu0 0.0
  %155 = vmatpush1.msra.mxu0 %v107
  %156 = vmatprep.subr.mxu0 0.0
  %157 = vmatpush1.msra.mxu0 %v106
  %158 = vmatprep.subr.mxu0 0.0
  %159 = vmatpush1.msra.mxu0 %v105
  %160 = vmatprep.subr.mxu0 0.0
  %161 = vmatpush2.msra.mxu0 0.0
  %162 = vmatprep.subr.mxu0 0.0
  %163 = vmatpush2.msra.mxu0 0.0
  %164 = vmatprep.subr.mxu0 0.0
  %165 = vmatpush2.msra.mxu0 0.0
  %166 = vmatprep.subr.mxu0 0.0
  %167 = vmatpush2.msra.mxu0 0.0
  %168 = vmatprep.subr.mxu0 0.0
  %169 = vmatpush2.msra.mxu0 0.0
  %170 = vmatprep.subr.mxu0 0.0
  %171 = vmatpush2.msra.mxu0 0.0
  %172 = vmatprep.subr.mxu0 0.0
  %173 = vmatpush2.msra.mxu0 0.0
  %174 = vmatprep.subr.mxu0 0.0
  %175 = vmatpush2.msra.mxu0 0.0
  %176 = vmatprep.subr.mxu0 0.0
  %177 = vmatpush2.msra.mxu0 0.0
  %178 = vmatprep.subr.mxu0 0.0
  %179 = vmatpush2.msra.mxu0 0.0
  %180 = vmatprep.subr.mxu0 0.0
  %181 = vmatpush2.msra.mxu0 0.0
  %182 = vmatprep.subr.mxu0 0.0
  %183 = vmatpush2.msra.mxu0 0.0
  %184 = vmatprep.subr.mxu0 0.0
  %185 = vmatpush2.msra.mxu0 0.0
  %186 = vmatprep.subr.mxu0 0.0
  %187 = vmatpush2.msra.mxu0 0.0
  %188 = vmatprep.subr.mxu0 0.0
  %189 = vmatpush2.msra.mxu0 0.0
  %190 = vmatprep.subr.mxu0 0.0
  %191 = vmatpush2.msra.mxu0 0.0
  %192 = vmatprep.mubr.f32.mxu0 0.0
  %193 = vmatmul.mubr.f32.gmra.mxu0 %v104
  %v194 = vpop.f32.mrf.mxu0
  %v195 = vadd.f32 %v126, %v194
  %v196 = vpop.f32.mrf.mxu0
  %197 = vdwg.mxu0
  %198 = vst [vmem:[%s5] sm:$0xff] %v195
  // Predicated region
  $region22: #{dnn_forward.1} parent=0 // pred_check
    _
  $region23: #{dnn_forward.1} parent=0 // pred_check_branch
    %200 = sbr.rel (0) target = $region25
  $region24: #{dnn_forward.1} parent=0 // pred_region
    _
  $region25: #{dnn_forward.1} parent=0 // pred_fallthru
    _
  // Predicated region
  $region26: #{dnn_forward.1} parent=0 // pred_check
    _
  $region27: #{dnn_forward.1} parent=0 // pred_check_branch
    %202 = sbr.rel (0) target = $region29
  $region28: #{dnn_forward.1} parent=0 // pred_region
    _
  $region29: #{dnn_forward.1} parent=0 // pred_fallthru
    _

</llo_original>
